<compile_context>
chip_gen: v6e
topology: v6e:2x2x1
jax: 0.10.0
libtpu: 0.0.40
codegen_flags: <defaults>
</compile_context>

<pallas_src>
import functools

import jax
import jax.numpy as jnp
from jax import lax
from jax.experimental import pallas as pl
from jax.experimental.pallas import tpu as pltpu


def basic_block5x5_kernel(x_ref, w1_ref, w2_ref, bn_ref, o_ref, *,
                          m_out, m_h, lpp, lo1):
    """One batch tile per grid step, flattened to a channel-last (rows, C) slab.

    x_ref  : (1, m_out + 16, Cin) f32 -- b_tile segments of length Lpp = L + 4,
             each = [0, 0, x[b, :], 0, 0], plus 16 zero tail rows.
    w1_ref : (5*Cin,  Cout) conv1 weights, tap-major rows (compute dtype).
    w2_ref : (5*Cout, Cout) conv2 weights, tap-major rows (compute dtype).
    bn_ref : (4, Cout) f32 folded BN params: rows = [s1, b1, s2, b2].
    o_ref  : (1, m_out, Cout) -- rows j in [0, L-4) of each segment are the
             block output; the remaining rows are discarded by the wrapper.
    """
    xf = x_ref[0]                              # (m_out + 16, C) f32
    xc = xf.astype(w1_ref.dtype)               # bf16 MXU operand by default

    bn = bn_ref[...]                           # (4, C) f32
    s1, b1, s2, b2 = bn[0:1], bn[1:2], bn[2:3], bn[3:4]

    # ---- conv1 as ONE big-K matmul: im2col concat of the 5 tap slices ----
    x5 = jnp.concatenate([xc[k:k + m_h] for k in range(5)], axis=1)   # (m_h, 5*Cin)
    acc1 = jnp.dot(x5, w1_ref[...], preferred_element_type=jnp.float32)

    # conv2 halo mask, generated in-kernel: per-segment positions 1..lo1 hold
    # valid conv1 output; position 0 and positions > lo1 are the pad-1 zero
    # halo (and also kill cross-segment contamination of the flattened slab).
    pos = lax.broadcasted_iota(jnp.int32, (m_h, 1), 0) % lpp
    keep = ((pos >= 1) & (pos <= lo1)).astype(jnp.float32)

    # ---- bn1 affine + ReLU + halo mask + bf16 cast, fused (single hc slab) ----
    hc = (jnp.maximum(acc1 * s1 + b1, 0.0) * keep).astype(w2_ref.dtype)

    # ---- conv2 + bn2, again one big-K matmul over m_out rows ----
    h5 = jnp.concatenate([hc[k:k + m_out] for k in range(5)], axis=1)  # (m_out, 5*Cout)
    out2 = jnp.dot(h5, w2_ref[...], preferred_element_type=jnp.float32) * s2 + b2

    # ---- residual (x[b, j] lives at padded-segment row j + 2) + ReLU ----
    o_ref[0] = jnp.maximum(xf[2:2 + m_out] + out2, 0.0).astype(o_ref.dtype)


# Per-grid-step VMEM footprint model (bytes per f32-activation-tile byte):
#   2x f32 input + 2x f32 output double buffers, bf16 copy, (rows, 5C) bf16
#   im2col operands for both convs, f32 accumulators / store temp  ~= 14x.
_FOOTPRINT_MULT = 14
_VMEM_TARGET = 20 << 20          # conservative: fits v5e/v6e/v7x scoped VMEM
_VMEM_LIMIT = 32 * 1024 * 1024   # raise v5e's 16 MiB default; <= physical everywhere


def _pick_batch_tile(n, lpp, c, compute_itemsize):
    """Largest batch tile whose estimated per-step footprint fits the target,
    while guaranteeing >= 2 grid steps (both v7x TensorCores get work)."""
    w_bytes = 2 * (5 * c * c * compute_itemsize) * 2   # both convs, double-buffered
    per_b = lpp * c * 4                                 # f32 activation bytes / batch elem
    avail = max(_VMEM_TARGET - w_bytes, _FOOTPRINT_MULT * per_b)
    b_tile = max(1, min(n, avail // (_FOOTPRINT_MULT * per_b)))
    if n >= 2:
        b_tile = min(b_tile, (n + 1) // 2)              # >= 2 parallel grid steps
    num_tiles = pl.cdiv(n, b_tile)
    return int(b_tile), int(num_tiles)


def basic_block5x5(x_ncl, w1, w2, bn1, bn2, eps=1e-5,
                   compute_dtype=jnp.bfloat16):
    """x_ncl: (N, C, L) float32 (PyTorch NCL).  w*: (Cout, Cin, 5)."""
    n, c, l = x_ncl.shape
    cout, cin, kk = w1.shape
    assert kk == 5 and cin == c, (w1.shape, x_ncl.shape)
    assert cout == c, "downsample is None -> inplanes5 must equal planes"
    assert w2.shape == (cout, cout, 5), w2.shape
    assert l >= 5, "need L >= 5 for two valid 5-tap convs"

    lo1, lo2, lpp = l - 2, l - 4, l + 4      # conv1 len, conv2 len, padded len
    b_tile, num_tiles = _pick_batch_tile(
        n, lpp, c, jnp.dtype(compute_dtype).itemsize)
    n_pad = b_tile * num_tiles
    m_out = b_tile * lpp                     # flat rows per grid step (output)
    m_h = m_out + 8                          # flat rows of conv1 intermediate
    tr = m_out + 16                          # flat rows of padded input tile

    # ---- layout plumbing (XLA-side glue, no hot-path compute) ----
    x_nlc = jnp.transpose(x_ncl, (0, 2, 1)).astype(jnp.float32)       # (N, L, C)
    # single pad: trailing batch pad (grid alignment) + per-element 2/2 L halo
    xpp = jnp.pad(x_nlc, ((0, n_pad - n), (2, 2), (0, 0)))            # (Np, Lpp, C)
    x_tiles = jnp.pad(xpp.reshape(num_tiles, m_out, c),
                      ((0, 0), (0, 16), (0, 0)))                      # (T, TR, C)

    # tap-major weights flattened to (5*Cin, Cout) for the single big-K matmul
    w1_flat = jnp.transpose(w1, (2, 1, 0)).reshape(5 * cin, cout).astype(compute_dtype)
    w2_flat = jnp.transpose(w2, (2, 1, 0)).reshape(5 * cout, cout).astype(compute_dtype)

    def fold(bn):
        gamma, beta, mean, var = bn
        scale = gamma / jnp.sqrt(var + eps)
        return scale, beta - mean * scale

    s1, b1 = fold(bn1)
    s2, b2 = fold(bn2)
    bn_params = jnp.stack([s1, b1, s2, b2]).astype(jnp.float32)       # (4, C)

    kernel = functools.partial(basic_block5x5_kernel,
                               m_out=m_out, m_h=m_h, lpp=lpp, lo1=lo1)
    out_flat = pl.pallas_call(
        kernel,
        out_shape=jax.ShapeDtypeStruct((num_tiles, m_out, c), jnp.float32),
        grid_spec=pltpu.PrefetchScalarGridSpec(
            num_scalar_prefetch=0,
            grid=(num_tiles,),
            in_specs=[
                pl.BlockSpec((1, tr, c), lambda i: (i, 0, 0)),        # padded x tile
                pl.BlockSpec((5 * cin, cout), lambda i: (0, 0)),      # w1 (constant)
                pl.BlockSpec((5 * cout, cout), lambda i: (0, 0)),     # w2 (constant)
                pl.BlockSpec((4, c), lambda i: (0, 0)),               # folded BN params
            ],
            out_specs=pl.BlockSpec((1, m_out, c), lambda i: (i, 0, 0)),
        ),
        compiler_params=pltpu.CompilerParams(
            dimension_semantics=("parallel",),
            vmem_limit_bytes=_VMEM_LIMIT),
    )(x_tiles, w1_flat, w2_flat, bn_params)

    # Rows j in [0, lo2) of each Lpp segment are the real outputs.
    out_nlc = out_flat.reshape(n_pad, lpp, c)[:n, :lo2, :]
    return jnp.transpose(out_nlc, (0, 2, 1))                          # back to NCL


def basic_block5x5_reference(x, w1, w2, bn1, bn2, eps=1e-5):
    """Pure-JAX reference matching the PyTorch forward (inference-mode BN)."""
    def conv(inp, w):
        return lax.conv_general_dilated(
            inp, w, window_strides=(1,), padding=[(1, 1)],
            dimension_numbers=("NCH", "OIH", "NCH"))

    def bn(inp, p):
        g, b, m, v = p
        inv = g / jnp.sqrt(v + eps)
        return (inp - m[None, :, None]) * inv[None, :, None] + b[None, :, None]

    out = jax.nn.relu(bn(conv(x, w1), bn1))
    out = bn(conv(out, w2), bn2)
    d = x.shape[2] - out.shape[2]
    return jax.nn.relu(x[:, :, 0:-d] + out)


if __name__ == "__main__":
    N, C, L = 2, 4, 16      # inplanes5 == planes == C (downsample is None)

    key = jax.random.PRNGKey(0)
    kx, kw1, kw2, km1, kv1, km2, kv2 = jax.random.split(key, 7)

    x = jax.random.normal(kx, (N, C, L), dtype=jnp.float32)

    # Conv1d weights, PyTorch layout (Cout, Cin, 5), bias=False
    w1 = 0.3 * jax.random.normal(kw1, (C, C, 5), dtype=jnp.float32)
    w2 = 0.3 * jax.random.normal(kw2, (C, C, 5), dtype=jnp.float32)

    # BatchNorm1d params (inference): gamma, beta, running_mean, running_var
    bn1 = (1.0 + 0.1 * jnp.arange(C, dtype=jnp.float32),
           0.05 * jnp.arange(C, dtype=jnp.float32),
           0.1 * jax.random.normal(km1, (C,), dtype=jnp.float32),
           0.5 + jnp.abs(jax.random.normal(kv1, (C,), dtype=jnp.float32)))
    bn2 = (1.0 - 0.05 * jnp.arange(C, dtype=jnp.float32),
           -0.02 * jnp.arange(C, dtype=jnp.float32),
           0.1 * jax.random.normal(km2, (C,), dtype=jnp.float32),
           0.5 + jnp.abs(jax.random.normal(kv2, (C,), dtype=jnp.float32)))

    ref = basic_block5x5_reference(x, w1, w2, bn1, bn2)
    ref_scale = float(jnp.max(jnp.abs(ref)))

    # Exact path (f32 MXU operands): tight correctness gate.
    out_f32 = jax.block_until_ready(
        basic_block5x5(x, w1, w2, bn1, bn2, compute_dtype=jnp.float32))
    assert out_f32.shape == (N, C, L - 4), out_f32.shape
    err_f32 = float(jnp.max(jnp.abs(out_f32 - ref)))
    assert err_f32 < 1e-4, err_f32

    # Default path (bf16 MXU operands, f32 accumulation): scale-aware gate.
    out_bf16 = jax.block_until_ready(basic_block5x5(x, w1, w2, bn1, bn2))
    assert out_bf16.shape == (N, C, L - 4), out_bf16.shape
    err_bf16 = float(jnp.max(jnp.abs(out_bf16 - ref)))
    assert err_bf16 < 0.05 * (ref_scale + 1.0), (err_bf16, ref_scale)

    print("KERNEL_OK")
</pallas_src>

<mosaic_0001>
module attributes {stable_mosaic.version = 11 : i64} {
  func.func @basic_block5x5_kernel(%arg0: i32, %arg1: memref<1x36x4xf32, #tpu.memory_space<vmem>>, %arg2: memref<20x4xf32, #tpu.memory_space<vmem>>, %arg3: memref<20x4xf32, #tpu.memory_space<vmem>>, %arg4: memref<4x4xf32, #tpu.memory_space<vmem>>, %arg5: memref<1x20x4xf32, #tpu.memory_space<vmem>>) attributes {dimension_semantics = [#tpu.dimension_semantics<parallel>], iteration_bounds = array<i64: 2>, scalar_prefetch = 0 : i64, scratch_operands = 0 : i64, tpu.core_type = #tpu.core_type<tc>, window_params = [{transform_indices = @transform_0, window_bounds = array<i64: 1, 36, 4>}, {pipeline_mode = #tpu.pipeline_mode<synchronous>, transform_indices = @transform_1, window_bounds = array<i64: 20, 4>}, {pipeline_mode = #tpu.pipeline_mode<synchronous>, transform_indices = @transform_2, window_bounds = array<i64: 20, 4>}, {pipeline_mode = #tpu.pipeline_mode<synchronous>, transform_indices = @transform_3, window_bounds = array<i64: 4, 4>}, {transform_indices = @transform_4, window_bounds = array<i64: 1, 20, 4>}]} {
    %c0 = arith.constant 0 : index
    %c0_0 = arith.constant 0 : index
    %c0_1 = arith.constant 0 : index
    %0 = vector.load %arg1[%c0, %c0_0, %c0_1] : memref<1x36x4xf32, #tpu.memory_space<vmem>>, vector<1x36x4xf32>
    %1 = vector.shape_cast %0 : vector<1x36x4xf32> to vector<36x4xf32>
    %c0_2 = arith.constant 0 : index
    %c0_3 = arith.constant 0 : index
    %2 = vector.load %arg4[%c0_2, %c0_3] : memref<4x4xf32, #tpu.memory_space<vmem>>, vector<4x4xf32>
    %3 = vector.extract_strided_slice %2 {offsets = [0, 0], sizes = [1, 4], strides = [1, 1]} : vector<4x4xf32> to vector<1x4xf32>
    %4 = vector.extract_strided_slice %2 {offsets = [1, 0], sizes = [1, 4], strides = [1, 1]} : vector<4x4xf32> to vector<1x4xf32>
    %5 = vector.extract_strided_slice %2 {offsets = [2, 0], sizes = [1, 4], strides = [1, 1]} : vector<4x4xf32> to vector<1x4xf32>
    %6 = vector.extract_strided_slice %2 {offsets = [3, 0], sizes = [1, 4], strides = [1, 1]} : vector<4x4xf32> to vector<1x4xf32>
    %7 = vector.extract_strided_slice %1 {offsets = [0, 0], sizes = [28, 4], strides = [1, 1]} : vector<36x4xf32> to vector<28x4xf32>
    %8 = vector.extract_strided_slice %1 {offsets = [1, 0], sizes = [28, 4], strides = [1, 1]} : vector<36x4xf32> to vector<28x4xf32>
    %9 = vector.extract_strided_slice %1 {offsets = [2, 0], sizes = [28, 4], strides = [1, 1]} : vector<36x4xf32> to vector<28x4xf32>
    %10 = vector.extract_strided_slice %1 {offsets = [3, 0], sizes = [28, 4], strides = [1, 1]} : vector<36x4xf32> to vector<28x4xf32>
    %11 = vector.extract_strided_slice %1 {offsets = [4, 0], sizes = [28, 4], strides = [1, 1]} : vector<36x4xf32> to vector<28x4xf32>
    %12 = tpu.concatenate %7, %8, %9, %10, %11 in 1 : vector<28x4xf32>, vector<28x4xf32>, vector<28x4xf32>, vector<28x4xf32>, vector<28x4xf32> -> vector<28x20xf32>
    %c0_4 = arith.constant 0 : index
    %c0_5 = arith.constant 0 : index
    %13 = vector.load %arg2[%c0_4, %c0_5] : memref<20x4xf32, #tpu.memory_space<vmem>>, vector<20x4xf32>
    %cst = arith.constant dense<0.000000e+00> : vector<28x4xf32>
    %14 = tpu.matmul %12, %13, %cst {dimension_numbers = #tpu.dot_dimension_numbers<[1], [0], [0], [1], [0, 0, 1, 1], [], []>} : vector<28x20xf32>, vector<20x4xf32>, vector<28x4xf32> -> vector<28x4xf32>
    %15 = tpu.iota {dimensions = array<i32: 0>} : vector<28x1xi32>
    %c20_i32 = arith.constant 20 : i32
    %c0_i32 = arith.constant 0 : i32
    %16 = arith.cmpi eq, %c20_i32, %c0_i32 : i32
    %c1_i32 = arith.constant 1 : i32
    %17 = arith.select %16, %c1_i32, %c20_i32 : i32
    %18 = vector.broadcast %17 : i32 to vector<28x1xi32>
    %19 = arith.remsi %15, %18 : vector<28x1xi32>
    %c0_i32_6 = arith.constant 0 : i32
    %20 = vector.broadcast %c0_i32_6 : i32 to vector<28x1xi32>
    %21 = arith.cmpi ne, %19, %20 : vector<28x1xi32>
    %c0_i32_7 = arith.constant 0 : i32
    %22 = vector.broadcast %c0_i32_7 : i32 to vector<28x1xi32>
    %23 = arith.cmpi slt, %19, %22 : vector<28x1xi32>
    %c0_i32_8 = arith.constant 0 : i32
    %24 = arith.cmpi slt, %17, %c0_i32_8 : i32
    %25 = vector.broadcast %24 : i1 to vector<28x1xi1>
    %26 = vector.broadcast %25 : vector<28x1xi1> to vector<28x1xi1>
    %27 = arith.xori %23, %26 : vector<28x1xi1>
    %28 = arith.andi %27, %21 : vector<28x1xi1>
    %29 = vector.broadcast %17 : i32 to vector<28x1xi32>
    %30 = arith.addi %19, %29 : vector<28x1xi32>
    %31 = arith.select %28, %30, %19 : vector<28x1xi1>, vector<28x1xi32>
    %c1_i32_9 = arith.constant 1 : i32
    %32 = vector.broadcast %c1_i32_9 : i32 to vector<28x1xi32>
    %33 = arith.cmpi sge, %31, %32 : vector<28x1xi32>
    %c14_i32 = arith.constant 14 : i32
    %34 = vector.broadcast %c14_i32 : i32 to vector<28x1xi32>
    %35 = arith.cmpi sle, %31, %34 : vector<28x1xi32>
    %36 = arith.andi %33, %35 : vector<28x1xi1>
    %37 = arith.extui %36 : vector<28x1xi1> to vector<28x1xi32>
    %38 = arith.sitofp %37 : vector<28x1xi32> to vector<28x1xf32>
    %39 = vector.broadcast %3 : vector<1x4xf32> to vector<28x4xf32>
    %40 = arith.mulf %14, %39 : vector<28x4xf32>
    %41 = vector.broadcast %4 : vector<1x4xf32> to vector<28x4xf32>
    %42 = arith.addf %40, %41 : vector<28x4xf32>
    %cst_10 = arith.constant 0.000000e+00 : f32
    %43 = vector.broadcast %cst_10 : f32 to vector<28x4xf32>
    %44 = arith.maximumf %42, %43 : vector<28x4xf32>
    %45 = vector.broadcast %38 : vector<28x1xf32> to vector<28x4xf32>
    %46 = arith.mulf %44, %45 : vector<28x4xf32>
    %47 = vector.extract_strided_slice %46 {offsets = [0, 0], sizes = [20, 4], strides = [1, 1]} : vector<28x4xf32> to vector<20x4xf32>
    %48 = vector.extract_strided_slice %46 {offsets = [1, 0], sizes = [20, 4], strides = [1, 1]} : vector<28x4xf32> to vector<20x4xf32>
    %49 = vector.extract_strided_slice %46 {offsets = [2, 0], sizes = [20, 4], strides = [1, 1]} : vector<28x4xf32> to vector<20x4xf32>
    %50 = vector.extract_strided_slice %46 {offsets = [3, 0], sizes = [20, 4], strides = [1, 1]} : vector<28x4xf32> to vector<20x4xf32>
    %51 = vector.extract_strided_slice %46 {offsets = [4, 0], sizes = [20, 4], strides = [1, 1]} : vector<28x4xf32> to vector<20x4xf32>
    %52 = tpu.concatenate %47, %48, %49, %50, %51 in 1 : vector<20x4xf32>, vector<20x4xf32>, vector<20x4xf32>, vector<20x4xf32>, vector<20x4xf32> -> vector<20x20xf32>
    %c0_11 = arith.constant 0 : index
    %c0_12 = arith.constant 0 : index
    %53 = vector.load %arg3[%c0_11, %c0_12] : memref<20x4xf32, #tpu.memory_space<vmem>>, vector<20x4xf32>
    %cst_13 = arith.constant dense<0.000000e+00> : vector<20x4xf32>
    %54 = tpu.matmul %52, %53, %cst_13 {dimension_numbers = #tpu.dot_dimension_numbers<[1], [0], [0], [1], [0, 0, 1, 1], [], []>} : vector<20x20xf32>, vector<20x4xf32>, vector<20x4xf32> -> vector<20x4xf32>
    %55 = vector.broadcast %5 : vector<1x4xf32> to vector<20x4xf32>
    %56 = arith.mulf %54, %55 : vector<20x4xf32>
    %57 = vector.broadcast %6 : vector<1x4xf32> to vector<20x4xf32>
    %58 = arith.addf %56, %57 : vector<20x4xf32>
    %59 = vector.extract_strided_slice %1 {offsets = [2, 0], sizes = [20, 4], strides = [1, 1]} : vector<36x4xf32> to vector<20x4xf32>
    %60 = arith.addf %59, %58 : vector<20x4xf32>
    %cst_14 = arith.constant 0.000000e+00 : f32
    %61 = vector.broadcast %cst_14 : f32 to vector<20x4xf32>
    %62 = arith.maximumf %60, %61 : vector<20x4xf32>
    %c0_15 = arith.constant 0 : index
    %c0_16 = arith.constant 0 : index
    %c0_17 = arith.constant 0 : index
    %63 = vector.load %arg5[%c0_15, %c0_16, %c0_17] : memref<1x20x4xf32, #tpu.memory_space<vmem>>, vector<1x20x4xf32>
    %64 = vector.shape_cast %63 : vector<1x20x4xf32> to vector<20x4xf32>
    %65 = vector.shape_cast %62 : vector<20x4xf32> to vector<1x20x4xf32>
    tpu.vector_store %arg5[%c0_15, %c0_16, %c0_17], %65 {strides = array<i32>} : memref<1x20x4xf32, #tpu.memory_space<vmem>>, vector<1x20x4xf32>,
    return
  }
  func.func @transform_0(%arg0: i32) -> (i32, i32, i32) {
    %c0_i32 = arith.constant 0 : i32
    %c0_i32_0 = arith.constant 0 : i32
    %c0_i32_1 = arith.constant 0 : i32
    return %arg0, %c0_i32, %c0_i32_0 : i32, i32, i32
  }
  func.func @transform_1(%arg0: i32) -> (i32, i32) {
    %c0_i32 = arith.constant 0 : i32
    %c0_i32_0 = arith.constant 0 : i32
    %c0_i32_1 = arith.constant 0 : i32
    return %c0_i32, %c0_i32_0 : i32, i32
  }
  func.func @transform_2(%arg0: i32) -> (i32, i32) {
    %c0_i32 = arith.constant 0 : i32
    %c0_i32_0 = arith.constant 0 : i32
    %c0_i32_1 = arith.constant 0 : i32
    return %c0_i32, %c0_i32_0 : i32, i32
  }
  func.func @transform_3(%arg0: i32) -> (i32, i32) {
    %c0_i32 = arith.constant 0 : i32
    %c0_i32_0 = arith.constant 0 : i32
    %c0_i32_1 = arith.constant 0 : i32
    return %c0_i32, %c0_i32_0 : i32, i32
  }
  func.func @transform_4(%arg0: i32) -> (i32, i32, i32) {
    %c0_i32 = arith.constant 0 : i32
    %c0_i32_0 = arith.constant 0 : i32
    %c0_i32_1 = arith.constant 0 : i32
    return %arg0, %c0_i32, %c0_i32_0 : i32, i32, i32
  }
}

</mosaic_0001>

<llo_original>
// kernel: tpu_custom_call.1
$region0: #{tpu_custom_call.1}
  #allocation0 [shape = 'u32[]', space=smem, size = 0x4, offset = 0x4, fixed_abs, tag = 'smem constant byte address 0x4 - core index']
  #allocation1 [shape = 'u32[144,128]{1,0:T(1,128)}', space=vmem, size = 0x12000, scoped, tag = 'internal scratch']
  %s0 = inlined_call_operand.vmem [shape: f32[2,36,4], index: 0, kind: input, shape index: {}]
  %s1 = inlined_call_operand.vmem [shape: f32[20,4], index: 1, kind: input, shape index: {}]
  %s2 = inlined_call_operand.vmem [shape: f32[20,4], index: 2, kind: input, shape index: {}]
  %s3 = inlined_call_operand.vmem [shape: f32[4,4], index: 3, kind: input, shape index: {}]
  %s4 = inlined_call_operand.vmem [shape: f32[2,20,4], index: 4, kind: output, shape index: {}]
  %s5 = sld [smem:[#allocation0]]
  $region49: #{tpu_custom_call.1} parent=0
    _
  %s7 = ssub.s32 1, %s5
  %s8 = scalar_select 0, %s7, %s5
  loop: start=0, step=1, limit=4
  $region2: #{tpu_custom_call.1} parent=0 // loop_pre_header
    _
  $region3: #{tpu_custom_call.1} parent=0 // loop_header
    %s10 = sphi 0, %s14
    %p11 = scmp.ge.s32.totalorder %s10, 4
    %s20 = sphi 0, %s22
    %s23 = sphi 0, %s20
    %s24 = sphi 0, %s23
    %s40 = sphi 0, %s24
    %s44 = sphi 0, %s44
    %s46 = sphi 0, %s44
    %s47 = sphi 0, %s46
    %s61 = sphi 0, %s47
    %s65 = sphi 0, %s65
    %s67 = sphi 0, %s65
    %s68 = sphi 0, %s67
    %s82 = sphi 0, %s68
    %s86 = sphi 0, %s86
    %s88 = sphi 0, %s86
    %s89 = sphi 0, %s88
    %s103 = sphi 0, %s89
    %s109 = sphi 0, %s111
    %s112 = sphi 0, %s109
    %s113 = sphi 0, %s112
    %s129 = sphi 0, %s113
  $region4: #{tpu_custom_call.1} parent=0 // loop_header_branch
    %13 = sbr.rel (%p11) target = $region8
  $region5: #{tpu_custom_call.1} parent=0 // loop_body
    %s15 = ssub.s32 %s10, 1
    %s16 = ssub.s32 %s10, 2
    %s17 = sadd.s32 %s10, 1
    %s18 = ssub.s32 %s10, %s17
    %p19 = scmp.eq.s32.totalorder %s18, 0
    %s21 = sadd.s32 %s20, 1
    %s22 = scalar_select %p19, %s20, %s21
    %p25 = pneg %p19
    %p26 = scmp.eq.s32.totalorder %s10, 1
    %p27 = por %p25, %p26
    %p28 = scmp.ne.s32.totalorder %s20, %s23
    %p29 = scmp.eq.s32.totalorder %s10, 0
    %p30 = por %p28, %p29
    %p31 = scmp.ne.s32.totalorder %s20, %s23
    %p32 = scmp.eq.s32.totalorder %s15, 1
    %p33 = por %p31, %p32
    %p34 = scmp.ne.s32.totalorder %s23, %s24
    %p35 = scmp.eq.s32.totalorder %s15, 0
    %p36 = por %p34, %p35
    %p37 = scmp.ne.s32.totalorder %s23, %s24
    %p38 = scmp.eq.s32.totalorder %s16, 1
    %p39 = por %p37, %p38
    %p41 = scmp.ne.s32.totalorder %s24, %s40
    %p42 = scmp.eq.s32.totalorder %s16, 0
    %p43 = por %p41, %p42
    %s45 = sadd.s32 %s44, 1
    %p48 = scmp.eq.s32.totalorder %s10, 1
    %p49 = scmp.ne.s32.totalorder %s44, %s46
    %p50 = scmp.eq.s32.totalorder %s10, 0
    %p51 = por %p49, %p50
    %p52 = scmp.ne.s32.totalorder %s44, %s46
    %p53 = scmp.eq.s32.totalorder %s15, 1
    %p54 = por %p52, %p53
    %p55 = scmp.ne.s32.totalorder %s46, %s47
    %p56 = scmp.eq.s32.totalorder %s15, 0
    %p57 = por %p55, %p56
    %p58 = scmp.ne.s32.totalorder %s46, %s47
    %p59 = scmp.eq.s32.totalorder %s16, 1
    %p60 = por %p58, %p59
    %p62 = scmp.ne.s32.totalorder %s47, %s61
    %p63 = scmp.eq.s32.totalorder %s16, 0
    %p64 = por %p62, %p63
    %s66 = sadd.s32 %s65, 1
    %p69 = scmp.eq.s32.totalorder %s10, 1
    %p70 = scmp.ne.s32.totalorder %s65, %s67
    %p71 = scmp.eq.s32.totalorder %s10, 0
    %p72 = por %p70, %p71
    %p73 = scmp.ne.s32.totalorder %s65, %s67
    %p74 = scmp.eq.s32.totalorder %s15, 1
    %p75 = por %p73, %p74
    %p76 = scmp.ne.s32.totalorder %s67, %s68
    %p77 = scmp.eq.s32.totalorder %s15, 0
    %p78 = por %p76, %p77
    %p79 = scmp.ne.s32.totalorder %s67, %s68
    %p80 = scmp.eq.s32.totalorder %s16, 1
    %p81 = por %p79, %p80
    %p83 = scmp.ne.s32.totalorder %s68, %s82
    %p84 = scmp.eq.s32.totalorder %s16, 0
    %p85 = por %p83, %p84
    %s87 = sadd.s32 %s86, 1
    %p90 = scmp.eq.s32.totalorder %s10, 1
    %p91 = scmp.ne.s32.totalorder %s86, %s88
    %p92 = scmp.eq.s32.totalorder %s10, 0
    %p93 = por %p91, %p92
    %p94 = scmp.ne.s32.totalorder %s86, %s88
    %p95 = scmp.eq.s32.totalorder %s15, 1
    %p96 = por %p94, %p95
    %p97 = scmp.ne.s32.totalorder %s88, %s89
    %p98 = scmp.eq.s32.totalorder %s15, 0
    %p99 = por %p97, %p98
    %p100 = scmp.ne.s32.totalorder %s88, %s89
    %p101 = scmp.eq.s32.totalorder %s16, 1
    %p102 = por %p100, %p101
    %p104 = scmp.ne.s32.totalorder %s89, %s103
    %p105 = scmp.eq.s32.totalorder %s16, 0
    %p106 = por %p104, %p105
    %s107 = ssub.s32 %s10, %s17
    %p108 = scmp.eq.s32.totalorder %s107, 0
    %s110 = sadd.s32 %s109, 1
    %s111 = scalar_select %p108, %s109, %s110
    %p114 = pneg %p108
    %p115 = scmp.eq.s32.totalorder %s10, 1
    %p116 = por %p114, %p115
    %p117 = scmp.ne.s32.totalorder %s109, %s112
    %p118 = scmp.eq.s32.totalorder %s10, 0
    %p119 = por %p117, %p118
    %p120 = scmp.ne.s32.totalorder %s109, %s112
    %p121 = scmp.eq.s32.totalorder %s15, 1
    %p122 = por %p120, %p121
    %p123 = scmp.ne.s32.totalorder %s112, %s113
    %p124 = scmp.eq.s32.totalorder %s15, 0
    %p125 = por %p123, %p124
    %p126 = scmp.ne.s32.totalorder %s112, %s113
    %p127 = scmp.eq.s32.totalorder %s16, 1
    %p128 = por %p126, %p127
    %p130 = scmp.ne.s32.totalorder %s113, %s129
    %p131 = scmp.eq.s32.totalorder %s16, 0
    %p132 = por %p130, %p131
    %p133 = scmp.le.s32.totalorder 1, %s10
    %p134 = scmp.lt.s32.totalorder %s10, 3
    %p135 = pnand %p133, %p134
    %p136 = pneg %p135
    // Predicated region
    $region9: #{tpu_custom_call.1} parent=5 // pred_check
      _
    $region10: #{tpu_custom_call.1} parent=5 // pred_check_branch
      %138 = sbr.rel (%p135) target = $region12
    $region11: #{tpu_custom_call.1} parent=5 // pred_region
      %s139 = ssub.s32 %s10, 1
      // Predicated region
      $region13: #{tpu_custom_call.1} parent=11 // pred_check
        %p140 = pneg %p57
      $region14: #{tpu_custom_call.1} parent=11 // pred_check_branch
        %142 = sbr.rel (%p140) target = $region16
      $region15: #{tpu_custom_call.1} parent=11 // pred_region
        _
      $region16: #{tpu_custom_call.1} parent=11 // pred_fallthru
        _
      // Predicated region
      $region17: #{tpu_custom_call.1} parent=11 // pred_check
        %p143 = pneg %p78
      $region18: #{tpu_custom_call.1} parent=11 // pred_check_branch
        %145 = sbr.rel (%p143) target = $region20
      $region19: #{tpu_custom_call.1} parent=11 // pred_region
        _
      $region20: #{tpu_custom_call.1} parent=11 // pred_fallthru
        _
      // Predicated region
      $region21: #{tpu_custom_call.1} parent=11 // pred_check
        %p146 = pneg %p99
      $region22: #{tpu_custom_call.1} parent=11 // pred_check_branch
        %148 = sbr.rel (%p146) target = $region24
      $region23: #{tpu_custom_call.1} parent=11 // pred_region
        _
      $region24: #{tpu_custom_call.1} parent=11 // pred_fallthru
        _
    $region12: #{tpu_custom_call.1} parent=5 // pred_fallthru
      _
    %p149 = scmp.lt.s32.totalorder %s10, 2
    // Predicated region
    $region25: #{tpu_custom_call.1} parent=5 // pred_check
      %p150 = pneg %p149
    $region26: #{tpu_custom_call.1} parent=5 // pred_check_branch
      %152 = sbr.rel (%p150) target = $region28
    $region27: #{tpu_custom_call.1} parent=5 // pred_region
      // Predicated region
      $region29: #{tpu_custom_call.1} parent=27 // pred_check
        %p153 = pneg %p30
      $region30: #{tpu_custom_call.1} parent=27 // pred_check_branch
        %155 = sbr.rel (%p153) target = $region32
      $region31: #{tpu_custom_call.1} parent=27 // pred_region
        %p156 = scmp.lt.s32.totalorder %s10, 1
        %s157 = scalar_select %p156, %s10, 1
        %s158 = smul.addr %s157, 5
        %s159 = smul.addr %s158, 8
        %s160 = scalar_lea.vmem %s0, %s159
      $region32: #{tpu_custom_call.1} parent=27 // pred_fallthru
        _
    $region28: #{tpu_custom_call.1} parent=5 // pred_fallthru
      _
    %p161 = scmp.le.s32.totalorder 1, %s10
    %p162 = scmp.lt.s32.totalorder %s10, 3
    %p163 = pnand %p161, %p162
    %p164 = pneg %p163
    // Predicated region
    $region33: #{tpu_custom_call.1} parent=5 // pred_check
      _
    $region34: #{tpu_custom_call.1} parent=5 // pred_check_branch
      %166 = sbr.rel (%p163) target = $region36
    $region35: #{tpu_custom_call.1} parent=5 // pred_region
      %s167 = ssub.s32 %s10, 1
      %p168 = scmp.lt.s32.totalorder %s15, 1
      %s169 = scalar_select %p168, %s15, 1
      %s170 = smul.addr %s169, 5
      %s171 = smul.addr %s170, 8
      %s172 = scalar_lea.vmem %s0, %s171
      %p173 = pneg %p36
      %p174 = pneg %p33
      %p175 = pneg %p57
      %p176 = pneg %p54
      %p177 = pneg %p78
      %p178 = pneg %p75
      %p179 = pneg %p99
      %p180 = pneg %p96
      %p181 = pneg %p125
      %p182 = pneg %p122
      %p183 = scmp.lt.s32.totalorder %s15, 1
      %s184 = scalar_select %p183, %s15, 1
      %s185 = smul.addr %s184, 3
      %s186 = smul.addr %s185, 8
      %s187 = scalar_lea.vmem %s4, %s186
      %p188 = scmp.lt.s32.totalorder %s15, 1
      %s189 = scalar_select %p188, %s15, 1
      %s190 = smul.addr %s189, 5
      %s191 = smul.addr %s190, 8
      %s192 = scalar_lea.vmem %s0, %s191
      %p193 = scmp.lt.s32.totalorder %s15, 1
      %s194 = scalar_select %p193, %s15, 1
      %s195 = smul.addr %s194, 3
      %s196 = smul.addr %s195, 8
      %s197 = scalar_lea.vmem %s4, %s196
      %v198 = vld [vmem:[%s192] sm:$0xff]
      %v199 = vld [vmem:[%s192 + $0x8] sm:$0xff]
      %v200 = vld [vmem:[%s192 + $0x10] sm:$0xff]
      %v201 = vld [vmem:[%s192 + $0x18] sm:$0xff]
      %v202 = vld [vmem:[%s3] sm:$0xf]
      %vm207 = vcmask 1046528
      %v208 = vrot.slane %v198, 1
      %v209 = vrot.slane %v199, 1
      %v210 = vsel %vm207, %v208, %v209
      %v211 = vrot.slane %v200, 1
      %v212 = vsel %vm207, %v209, %v211
      %v213 = vrot.slane %v201, 1
      %v214 = vsel %vm207, %v211, %v213
      %215 = vrot.lane.b32.xlu0 %v210, 4
      %v216 = vpop.permute.xlu0 %215
      %217 = vrot.lane.b32.xlu0 %v212, 4
      %v218 = vpop.permute.xlu0 %217
      %219 = vrot.lane.b32.xlu0 %v214, 4
      %v220 = vpop.permute.xlu0 %219
      %221 = vrot.lane.b32.xlu0 %v213, 4
      %v222 = vpop.permute.xlu0 %221
      %vm227 = vcmask 1045504
      %v228 = vrot.slane %v198, 2
      %v229 = vrot.slane %v199, 2
      %v230 = vsel %vm227, %v228, %v229
      %v231 = vrot.slane %v200, 2
      %v232 = vsel %vm227, %v229, %v231
      %v233 = vrot.slane %v201, 2
      %v234 = vsel %vm227, %v231, %v233
      %235 = vrot.lane.b32.xlu0 %v230, 8
      %v236 = vpop.permute.xlu0 %235
      %237 = vrot.lane.b32.xlu0 %v232, 8
      %v238 = vpop.permute.xlu0 %237
      %239 = vrot.lane.b32.xlu0 %v234, 8
      %v240 = vpop.permute.xlu0 %239
      %241 = vrot.lane.b32.xlu0 %v233, 8
      %v242 = vpop.permute.xlu0 %241
      %vm247 = vcmask 1044480
      %v248 = vrot.slane %v198, 3
      %v249 = vrot.slane %v199, 3
      %v250 = vsel %vm247, %v248, %v249
      %v251 = vrot.slane %v200, 3
      %v252 = vsel %vm247, %v249, %v251
      %v253 = vrot.slane %v201, 3
      %v254 = vsel %vm247, %v251, %v253
      %255 = vrot.lane.b32.xlu0 %v250, 12
      %v256 = vpop.permute.xlu0 %255
      %257 = vrot.lane.b32.xlu0 %v252, 12
      %v258 = vpop.permute.xlu0 %257
      %259 = vrot.lane.b32.xlu0 %v254, 12
      %v260 = vpop.permute.xlu0 %259
      %261 = vrot.lane.b32.xlu0 %v253, 12
      %v262 = vpop.permute.xlu0 %261
      %vm267 = vcmask 1043456
      %v268 = vrot.slane %v198, 4
      %v269 = vrot.slane %v199, 4
      %v270 = vsel %vm267, %v268, %v269
      %v271 = vrot.slane %v200, 4
      %v272 = vsel %vm267, %v269, %v271
      %v273 = vrot.slane %v201, 4
      %v274 = vsel %vm267, %v271, %v273
      %275 = vrot.lane.b32.xlu0 %v270, 16
      %v276 = vpop.permute.xlu0 %275
      %277 = vrot.lane.b32.xlu0 %v272, 16
      %v278 = vpop.permute.xlu0 %277
      %279 = vrot.lane.b32.xlu0 %v274, 16
      %v280 = vpop.permute.xlu0 %279
      %281 = vrot.lane.b32.xlu0 %v273, 16
      %v282 = vpop.permute.xlu0 %281
      %vm287 = vcmask 31744
      %v288 = vsel %vm287, %v198, %v216
      %v289 = vsel %vm287, %v199, %v218
      %v290 = vsel %vm287, %v200, %v220
      %v291 = vsel %vm287, %v201, %v222
      %vm292 = vcmask 64512
      %v293 = vsel %vm292, %v288, %v236
      %v294 = vsel %vm292, %v289, %v238
      %v295 = vsel %vm292, %v290, %v240
      %v296 = vsel %vm292, %v291, %v242
      %vm297 = vcmask 97280
      %v298 = vsel %vm297, %v293, %v256
      %v299 = vsel %vm297, %v294, %v258
      %v300 = vsel %vm297, %v295, %v260
      %v301 = vsel %vm297, %v296, %v262
      %vm302 = vcmask 130048
      %v303 = vsel %vm302, %v298, %v276
      %v304 = vsel %vm302, %v299, %v278
      %v305 = vsel %vm302, %v300, %v280
      %v306 = vsel %vm302, %v301, %v282
      %v307 = vld [vmem:[%s1] sm:$0xff]
      %v308 = vld [vmem:[%s1 + $0x8] sm:$0xff]
      %v309 = vld [vmem:[%s1 + $0x10] sm:$0xf]
      %vm310 = vcmask 162816
      %v312 = vsel %vm310, %v303, 0
      %v315 = vsel %vm310, %v304, 0
      %v318 = vsel %vm310, %v305, 0
      %v321 = vsel %vm310, %v306, 0
      %v324 = vsel %vm267, %v309, 0
      %326 = vmatprep.subr.mxu0 0.0
      %327 = vmatpush1.msra.mxu0 0.0
      %328 = vmatprep.subr.mxu0 0.0
      %329 = vmatpush1.msra.mxu0 0.0
      %330 = vmatprep.subr.mxu0 0.0
      %331 = vmatpush1.msra.mxu0 0.0
      %332 = vmatprep.subr.mxu0 0.0
      %333 = vmatpush1.msra.mxu0 0.0
      %334 = vmatprep.subr.mxu0 0.0
      %335 = vmatpush1.msra.mxu0 0.0
      %336 = vmatprep.subr.mxu0 0.0
      %337 = vmatpush1.msra.mxu0 0.0
      %338 = vmatprep.subr.mxu0 0.0
      %339 = vmatpush1.msra.mxu0 0.0
      %340 = vmatprep.subr.mxu0 0.0
      %341 = vmatpush1.msra.mxu0 0.0
      %342 = vmatprep.subr.mxu0 0.0
      %343 = vmatpush1.msra.mxu0 0.0
      %344 = vmatprep.subr.mxu0 0.0
      %345 = vmatpush1.msra.mxu0 0.0
      %346 = vmatprep.subr.mxu0 0.0
      %347 = vmatpush1.msra.mxu0 0.0
      %348 = vmatprep.subr.mxu0 0.0
      %349 = vmatpush1.msra.mxu0 0.0
      %350 = vmatprep.subr.mxu0 0.0
      %351 = vmatpush1.msra.mxu0 0.0
      %352 = vmatprep.subr.mxu0 0.0
      %353 = vmatpush1.msra.mxu0 %v324
      %354 = vmatprep.subr.mxu0 0.0
      %355 = vmatpush1.msra.mxu0 %v308
      %356 = vmatprep.subr.mxu0 0.0
      %357 = vmatpush1.msra.mxu0 %v307
      %358 = vmatprep.subr.mxu0 0.0
      %359 = vmatpush2.msra.mxu0 0.0
      %360 = vmatprep.subr.mxu0 0.0
      %361 = vmatpush2.msra.mxu0 0.0
      %362 = vmatprep.subr.mxu0 0.0
      %363 = vmatpush2.msra.mxu0 0.0
      %364 = vmatprep.subr.mxu0 0.0
      %365 = vmatpush2.msra.mxu0 0.0
      %366 = vmatprep.subr.mxu0 0.0
      %367 = vmatpush2.msra.mxu0 0.0
      %368 = vmatprep.subr.mxu0 0.0
      %369 = vmatpush2.msra.mxu0 0.0
      %370 = vmatprep.subr.mxu0 0.0
      %371 = vmatpush2.msra.mxu0 0.0
      %372 = vmatprep.subr.mxu0 0.0
      %373 = vmatpush2.msra.mxu0 0.0
      %374 = vmatprep.subr.mxu0 0.0
      %375 = vmatpush2.msra.mxu0 0.0
      %376 = vmatprep.subr.mxu0 0.0
      %377 = vmatpush2.msra.mxu0 0.0
      %378 = vmatprep.subr.mxu0 0.0
      %379 = vmatpush2.msra.mxu0 0.0
      %380 = vmatprep.subr.mxu0 0.0
      %381 = vmatpush2.msra.mxu0 0.0
      %382 = vmatprep.subr.mxu0 0.0
      %383 = vmatpush2.msra.mxu0 0.0
      %384 = vmatprep.subr.mxu0 0.0
      %385 = vmatpush2.msra.mxu0 0.0
      %386 = vmatprep.subr.mxu0 0.0
      %387 = vmatpush2.msra.mxu0 0.0
      %388 = vmatprep.subr.mxu0 0.0
      %389 = vmatpush2.msra.mxu0 0.0
      %390 = vmatprep.mubr.f32.mxu0 0.0
      %391 = vmatmul.mubr.f32.gmra.mxu0 %v312
      %v392 = vpop.f32.mrf.mxu0
      %v393 = vadd.f32 0.0, %v392
      %v394 = vpop.f32.mrf.mxu0
      %395 = vmatprep.mubr.f32.mxu0 0.0
      %396 = vmatmul.mubr.f32.gmra.mxu0 %v315
      %v397 = vpop.f32.mrf.mxu0
      %v398 = vadd.f32 0.0, %v397
      %v399 = vpop.f32.mrf.mxu0
      %400 = vmatprep.mubr.f32.mxu0 0.0
      %401 = vmatmul.mubr.f32.gmra.mxu0 %v318
      %v402 = vpop.f32.mrf.mxu0
      %v403 = vadd.f32 0.0, %v402
      %v404 = vpop.f32.mrf.mxu0
      %405 = vmatprep.mubr.f32.mxu0 0.0
      %406 = vmatmul.mubr.f32.gmra.mxu0 %v321
      %v407 = vpop.f32.mrf.mxu0
      %v408 = vpop.f32.mrf.mxu0
      %409 = vdwg.mxu0
      %v410 = vlaneseq
      %v411 = vshrl.u32 %v410, 7
      %v412 = vadd.s32 %v411, 8
      %v413 = vadd.s32 %v411, 16
      %vm414 = vcmp.lt.s32.totalorder %v411, 0
      %v415 = vsub.s32 0, %v411
      %v416 = vsel %vm414, %v415, %v411
      %v417 = vmul.u32.u64.compose %v416, 3435973837
      %v418 = vextract.low.u32 %v417
      %v419 = vextract.high.u32 %v417
      %v420 = vshrl.u32 %v419, 4
      %v421 = vmul.u32 %v420, 20
      %v422 = vsub.s32 %v416, %v421
      %v423 = vsub.s32 0, %v422
      %v424 = vsel %vm414, %v423, %v422
      %vm425 = vcmp.lt.s32.totalorder %v412, 0
      %v426 = vsub.s32 0, %v412
      %v427 = vsel %vm425, %v426, %v412
      %v428 = vmul.u32.u64.compose %v427, 3435973837
      %v429 = vextract.low.u32 %v428
      %v430 = vextract.high.u32 %v428
      %v431 = vshrl.u32 %v430, 4
      %v432 = vmul.u32 %v431, 20
      %v433 = vsub.s32 %v427, %v432
      %v434 = vsub.s32 0, %v433
      %v435 = vsel %vm425, %v434, %v433
      %vm436 = vcmp.lt.s32.totalorder %v413, 0
      %v437 = vsub.s32 0, %v413
      %v438 = vsel %vm436, %v437, %v413
      %v439 = vmul.u32.u64.compose %v438, 3435973837
      %v440 = vextract.low.u32 %v439
      %v441 = vextract.high.u32 %v439
      %v442 = vshrl.u32 %v441, 4
      %v443 = vmul.u32 %v442, 20
      %v444 = vsub.s32 %v438, %v443
      %v445 = vsub.s32 0, %v444
      %v446 = vsel %vm436, %v445, %v444
      %vm447 = vcmp.ne.s32.totalorder %v424, 0
      %vm448 = vcmp.ne.s32.totalorder %v435, 0
      %vm449 = vcmp.ne.s32.totalorder %v446, 0
      %vm450 = vcmp.lt.s32.totalorder %v424, 0
      %vm451 = vcmp.lt.s32.totalorder %v435, 0
      %vm452 = vcmp.lt.s32.totalorder %v446, 0
      %vm453 = vmand %vm450, %vm447
      %vm454 = vmand %vm451, %vm448
      %vm455 = vmand %vm452, %vm449
      %v456 = vadd.s32 %v424, 20
      %v457 = vadd.s32 %v435, 20
      %v458 = vadd.s32 %v446, 20
      %v459 = vsel %vm453, %v456, %v424
      %v460 = vsel %vm454, %v457, %v435
      %v461 = vsel %vm455, %v458, %v446
      %vm462 = vcmp.ge.s32.totalorder %v459, 1
      %vm463 = vcmp.ge.s32.totalorder %v460, 1
      %vm464 = vcmp.ge.s32.totalorder %v461, 1
      %vm465 = vcmp.le.s32.totalorder %v459, 14
      %vm466 = vcmp.le.s32.totalorder %v460, 14
      %vm467 = vcmp.le.s32.totalorder %v461, 14
      %vm468 = vmand %vm462, %vm465
      %vm469 = vmand %vm463, %vm466
      %vm470 = vmand %vm464, %vm467
      %v471 = vsel %vm468, 1, 0
      %v472 = vsel %vm469, 1, 0
      %v473 = vsel %vm470, 1, 0
      %v474 = vcvt.s32.f32 %v471
      %v475 = vcvt.s32.f32 %v472
      %v476 = vcvt.s32.f32 %v473
      %v477 = vlaneseq
      %v478 = vshrl.u32 %v477, 7
      %v479 = vsub.s32 0, %v478
      %v480 = vrot.slane %v202, %v479
      %v481 = vmul.f32 %v393, %v480
      %v482 = vmul.f32 %v398, %v480
      %v483 = vmul.f32 %v403, %v480
      %v484 = vlaneseq
      %v485 = vshrl.u32 %v484, 7
      %v486 = vsub.s32 1, %v485
      %v487 = vrot.slane %v202, %v486
      %v488 = vadd.f32 %v481, %v487
      %v489 = vadd.f32 %v482, %v487
      %v490 = vadd.f32 %v483, %v487
      %v491 = vmax.f32 %v488, 0.0
      %v492 = vmax.f32 %v489, 0.0
      %v493 = vmax.f32 %v490, 0.0
      %v494 = vmul.f32 %v491, %v474
      %v495 = vmul.f32 %v492, %v475
      %v496 = vmul.f32 %v493, %v476
      %v500 = vrot.slane %v494, 1
      %v501 = vrot.slane %v495, 1
      %v502 = vsel %vm207, %v500, %v501
      %v503 = vrot.slane %v496, 1
      %v504 = vsel %vm207, %v501, %v503
      %505 = vrot.lane.b32.xlu0 %v502, 4
      %v506 = vpop.permute.xlu0 %505
      %507 = vrot.lane.b32.xlu0 %v504, 4
      %v508 = vpop.permute.xlu0 %507
      %509 = vrot.lane.b32.xlu0 %v503, 4
      %v510 = vpop.permute.xlu0 %509
      %v514 = vrot.slane %v494, 2
      %v515 = vrot.slane %v495, 2
      %v516 = vsel %vm227, %v514, %v515
      %v517 = vrot.slane %v496, 2
      %v518 = vsel %vm227, %v515, %v517
      %519 = vrot.lane.b32.xlu0 %v516, 8
      %v520 = vpop.permute.xlu0 %519
      %521 = vrot.lane.b32.xlu0 %v518, 8
      %v522 = vpop.permute.xlu0 %521
      %523 = vrot.lane.b32.xlu0 %v517, 8
      %v524 = vpop.permute.xlu0 %523
      %v528 = vrot.slane %v494, 3
      %v529 = vrot.slane %v495, 3
      %v530 = vsel %vm247, %v528, %v529
      %v531 = vrot.slane %v496, 3
      %v532 = vsel %vm247, %v529, %v531
      %533 = vrot.lane.b32.xlu0 %v530, 12
      %v534 = vpop.permute.xlu0 %533
      %535 = vrot.lane.b32.xlu0 %v532, 12
      %v536 = vpop.permute.xlu0 %535
      %537 = vrot.lane.b32.xlu0 %v531, 12
      %v538 = vpop.permute.xlu0 %537
      %v542 = vrot.slane %v494, 4
      %v543 = vrot.slane %v495, 4
      %v544 = vsel %vm267, %v542, %v543
      %v545 = vrot.slane %v496, 4
      %v546 = vsel %vm267, %v543, %v545
      %547 = vrot.lane.b32.xlu0 %v544, 16
      %v548 = vpop.permute.xlu0 %547
      %549 = vrot.lane.b32.xlu0 %v546, 16
      %v550 = vpop.permute.xlu0 %549
      %551 = vrot.lane.b32.xlu0 %v545, 16
      %v552 = vpop.permute.xlu0 %551
      %v556 = vsel %vm287, %v494, %v506
      %v557 = vsel %vm287, %v495, %v508
      %v558 = vsel %vm287, %v496, %v510
      %v559 = vsel %vm292, %v556, %v520
      %v560 = vsel %vm292, %v557, %v522
      %v561 = vsel %vm292, %v558, %v524
      %v562 = vsel %vm297, %v559, %v534
      %v563 = vsel %vm297, %v560, %v536
      %v564 = vsel %vm297, %v561, %v538
      %v565 = vsel %vm302, %v562, %v548
      %v566 = vsel %vm302, %v563, %v550
      %v567 = vsel %vm302, %v564, %v552
      %v568 = vld [vmem:[%s2] sm:$0xff]
      %v569 = vld [vmem:[%s2 + $0x8] sm:$0xff]
      %v570 = vld [vmem:[%s2 + $0x10] sm:$0xf]
      %v572 = vsel %vm310, %v565, 0
      %v575 = vsel %vm310, %v566, 0
      %v578 = vsel %vm310, %v567, 0
      %v581 = vsel %vm267, %v570, 0
      %583 = vmatprep.subr.mxu0 0.0
      %584 = vmatpush1.msra.mxu0 0.0
      %585 = vmatprep.subr.mxu0 0.0
      %586 = vmatpush1.msra.mxu0 0.0
      %587 = vmatprep.subr.mxu0 0.0
      %588 = vmatpush1.msra.mxu0 0.0
      %589 = vmatprep.subr.mxu0 0.0
      %590 = vmatpush1.msra.mxu0 0.0
      %591 = vmatprep.subr.mxu0 0.0
      %592 = vmatpush1.msra.mxu0 0.0
      %593 = vmatprep.subr.mxu0 0.0
      %594 = vmatpush1.msra.mxu0 0.0
      %595 = vmatprep.subr.mxu0 0.0
      %596 = vmatpush1.msra.mxu0 0.0
      %597 = vmatprep.subr.mxu0 0.0
      %598 = vmatpush1.msra.mxu0 0.0
      %599 = vmatprep.subr.mxu0 0.0
      %600 = vmatpush1.msra.mxu0 0.0
      %601 = vmatprep.subr.mxu0 0.0
      %602 = vmatpush1.msra.mxu0 0.0
      %603 = vmatprep.subr.mxu0 0.0
      %604 = vmatpush1.msra.mxu0 0.0
      %605 = vmatprep.subr.mxu0 0.0
      %606 = vmatpush1.msra.mxu0 0.0
      %607 = vmatprep.subr.mxu0 0.0
      %608 = vmatpush1.msra.mxu0 0.0
      %609 = vmatprep.subr.mxu0 0.0
      %610 = vmatpush1.msra.mxu0 %v581
      %611 = vmatprep.subr.mxu0 0.0
      %612 = vmatpush1.msra.mxu0 %v569
      %613 = vmatprep.subr.mxu0 0.0
      %614 = vmatpush1.msra.mxu0 %v568
      %615 = vmatprep.subr.mxu0 0.0
      %616 = vmatpush2.msra.mxu0 0.0
      %617 = vmatprep.subr.mxu0 0.0
      %618 = vmatpush2.msra.mxu0 0.0
      %619 = vmatprep.subr.mxu0 0.0
      %620 = vmatpush2.msra.mxu0 0.0
      %621 = vmatprep.subr.mxu0 0.0
      %622 = vmatpush2.msra.mxu0 0.0
      %623 = vmatprep.subr.mxu0 0.0
      %624 = vmatpush2.msra.mxu0 0.0
      %625 = vmatprep.subr.mxu0 0.0
      %626 = vmatpush2.msra.mxu0 0.0
      %627 = vmatprep.subr.mxu0 0.0
      %628 = vmatpush2.msra.mxu0 0.0
      %629 = vmatprep.subr.mxu0 0.0
      %630 = vmatpush2.msra.mxu0 0.0
      %631 = vmatprep.subr.mxu0 0.0
      %632 = vmatpush2.msra.mxu0 0.0
      %633 = vmatprep.subr.mxu0 0.0
      %634 = vmatpush2.msra.mxu0 0.0
      %635 = vmatprep.subr.mxu0 0.0
      %636 = vmatpush2.msra.mxu0 0.0
      %637 = vmatprep.subr.mxu0 0.0
      %638 = vmatpush2.msra.mxu0 0.0
      %639 = vmatprep.subr.mxu0 0.0
      %640 = vmatpush2.msra.mxu0 0.0
      %641 = vmatprep.subr.mxu0 0.0
      %642 = vmatpush2.msra.mxu0 0.0
      %643 = vmatprep.subr.mxu0 0.0
      %644 = vmatpush2.msra.mxu0 0.0
      %645 = vmatprep.subr.mxu0 0.0
      %646 = vmatpush2.msra.mxu0 0.0
      %647 = vmatprep.mubr.f32.mxu0 0.0
      %648 = vmatmul.mubr.f32.gmra.mxu0 %v572
      %v649 = vpop.f32.mrf.mxu0
      %v650 = vadd.f32 0.0, %v649
      %v651 = vpop.f32.mrf.mxu0
      %652 = vmatprep.mubr.f32.mxu0 0.0
      %653 = vmatmul.mubr.f32.gmra.mxu0 %v575
      %v654 = vpop.f32.mrf.mxu0
      %v655 = vadd.f32 0.0, %v654
      %v656 = vpop.f32.mrf.mxu0
      %657 = vmatprep.mubr.f32.mxu0 0.0
      %658 = vmatmul.mubr.f32.gmra.mxu0 %v578
      %v659 = vpop.f32.mrf.mxu0
      %v660 = vadd.f32 0.0, %v659
      %v661 = vpop.f32.mrf.mxu0
      %662 = vdwg.mxu0
      %v663 = vlaneseq
      %v664 = vshrl.u32 %v663, 7
      %v665 = vsub.s32 2, %v664
      %v666 = vrot.slane %v202, %v665
      %v667 = vmul.f32 %v650, %v666
      %v668 = vmul.f32 %v655, %v666
      %v669 = vmul.f32 %v660, %v666
      %v670 = vlaneseq
      %v671 = vshrl.u32 %v670, 7
      %v672 = vsub.s32 3, %v671
      %v673 = vrot.slane %v202, %v672
      %v674 = vadd.f32 %v667, %v673
      %v675 = vadd.f32 %v668, %v673
      %v676 = vadd.f32 %v669, %v673
      %vm680 = vcmask 1041408
      %v681 = vrot.slane %v674, 6
      %v682 = vrot.slane %v675, 6
      %v683 = vsel %vm680, %v681, %v682
      %v684 = vrot.slane %v676, 6
      %v685 = vsel %vm680, %v682, %v684
      %v689 = vadd.f32 %v198, %v681
      %v690 = vadd.f32 %v199, %v683
      %v691 = vadd.f32 %v200, %v685
      %v692 = vmax.f32 %v689, 0.0
      %v693 = vmax.f32 %v690, 0.0
      %v694 = vmax.f32 %v691, 0.0
      %vm695 = vcmask 31746
      %696 = vst.msk [vmem:[%s197 - $0x2] sm:$0xfc] %vm695, %v692
      %697 = vst.msk [vmem:[%s197 + $0x6] sm:$0xff] %vm287, %v693
      %vm698 = vcmask 29696
      %699 = vst.msk [vmem:[%s197 + $0xe] sm:$0x3f] %vm698, %v694
      %p700 = scmp.lt.s32.totalorder %s15, 1
      %s701 = scalar_select %p700, %s15, 1
      %s702 = smul.addr %s701, 3
      %s703 = smul.addr %s702, 8
      %s704 = scalar_lea.vmem %s4, %s703
      // Predicated region
      $region37: #{tpu_custom_call.1} parent=35 // pred_check
        %p705 = pneg %p122
      $region38: #{tpu_custom_call.1} parent=35 // pred_check_branch
        %707 = sbr.rel (%p705) target = $region40
      $region39: #{tpu_custom_call.1} parent=35 // pred_region
        _
      $region40: #{tpu_custom_call.1} parent=35 // pred_fallthru
        _
    $region36: #{tpu_custom_call.1} parent=5 // pred_fallthru
      _
    %p708 = scmp.le.s32.totalorder 2, %s10
    // Predicated region
    $region41: #{tpu_custom_call.1} parent=5 // pred_check
      %p709 = pneg %p708
    $region42: #{tpu_custom_call.1} parent=5 // pred_check_branch
      %711 = sbr.rel (%p709) target = $region44
    $region43: #{tpu_custom_call.1} parent=5 // pred_region
      %s712 = ssub.s32 %s10, 2
      // Predicated region
      $region45: #{tpu_custom_call.1} parent=43 // pred_check
        %p713 = pneg %p128
      $region46: #{tpu_custom_call.1} parent=43 // pred_check_branch
        %715 = sbr.rel (%p713) target = $region48
      $region47: #{tpu_custom_call.1} parent=43 // pred_region
        %p716 = scmp.lt.s32.totalorder %s16, 1
        %s717 = scalar_select %p716, %s16, 1
        %s718 = smul.addr %s717, 3
        %s719 = smul.addr %s718, 8
        %s720 = scalar_lea.vmem %s4, %s719
      $region48: #{tpu_custom_call.1} parent=43 // pred_fallthru
        _
    $region44: #{tpu_custom_call.1} parent=5 // pred_fallthru
      _
  $region6: #{tpu_custom_call.1} parent=0 // loop_footer
    %s14 = sadd.s32 1, %s10
  $region7: #{tpu_custom_call.1} parent=0 // loop_footer_branch
    %9 = sbr.rel target = $region3
  $region8: #{tpu_custom_call.1} parent=0 // loop_exit
    _

</llo_original>
